<compile_context>
chip_gen: v6e
topology: v6e:2x2x1
jax: 0.10.0
libtpu: 0.0.40
codegen_flags: <defaults>
</compile_context>

<pallas_src>
import functools

import jax
import jax.numpy as jnp
from jax.experimental import pallas as pl
from jax.experimental.pallas import tpu as pltpu


def _rbf_kernel(x_ref, x2_ref, ct_ref, cs_ref, o_ref):
    """One (tm, tn) output tile.

    d2  = ||x_i||^2 + ||c_j||^2 - 2 * x_i . c_j      (MXU matmul hot path)
    out = exp(-d2 * sigma_j^2) = exp(min((x2 + c2 - 2*xc) * (-sigma^2), 0))
    """
    x = x_ref[...]                      # (tm, D)   input dtype (f32 or bf16)
    ct = ct_ref[...]                    # (D, tn)   pre-transposed centres
    x2 = x2_ref[...]                    # (tm, 1)   f32  ||x||^2 (precomputed)
    c2 = cs_ref[0:1, :]                 # (1, tn)   f32  ||c||^2 (precomputed)
    ns2 = cs_ref[1:2, :]                # (1, tn)   f32  -(sigma^2) (precomputed)

    xc = jnp.dot(x, ct, preferred_element_type=jnp.float32)       # (tm, tn) MXU
    t = (x2 + c2 - 2.0 * xc) * ns2      # == -d2 * sigma^2 (<= 0 up to fp error)
    o_ref[...] = jnp.exp(jnp.minimum(t, 0.0)).astype(o_ref.dtype)


def _round_up(v, m):
    return ((v + m - 1) // m) * m


@functools.partial(jax.jit, static_argnames=("block_m", "block_n"))
def rbf_forward(x, centres, sigmas, block_m=512, block_n=512):
    """Gaussian RBF forward: exp(-(cdist(x, centres) * |sigmas|)**2)."""
    N, D = x.shape
    M, Dc = centres.shape
    assert D == Dc and sigmas.shape == (1, M)

    xbytes = jnp.dtype(x.dtype).itemsize
    obytes = xbytes
    sub = 16 if x.dtype == jnp.bfloat16 else 8

    # Tile sizes: sublane multiple on the batch axis, 128 multiple on the lane
    # (centre) axis, regardless of what the caller passed (hard lowering req.).
    tm = _round_up(min(block_m, _round_up(N, sub)), sub)
    tn = _round_up(min(block_n, _round_up(M, 128)), 128)

    # Conservative VMEM guard (double-buffered inputs + output) so large
    # in_features never blows the scoped-VMEM default (esp. on v7x: 64 MiB).
    def vmem_est(tm_, tn_):
        return 2 * (tm_ * D * xbytes        # x tile
                    + D * tn_ * xbytes      # centres^T tile
                    + tm_ * 4               # ||x||^2 tile
                    + 2 * tn_ * 4           # stacked (||c||^2, -sigma^2) tile
                    + tm_ * tn_ * obytes)   # output tile
    budget = 12 * 1024 * 1024
    while vmem_est(tm, tn) > budget and tn > 128:
        tn = max(128, (tn // 2 // 128) * 128)
    while vmem_est(tm, tn) > budget and tm > sub:
        tm = max(sub, (tm // 2 // sub) * sub)

    n_pad = _round_up(N, tm)
    m_pad = _round_up(M, tn)

    x_p = x if n_pad == N else jnp.pad(x, ((0, n_pad - N), (0, 0)))
    c_p = centres if m_pad == M else jnp.pad(centres, ((0, m_pad - M), (0, 0)))
    s_p = sigmas if m_pad == M else jnp.pad(sigmas, ((0, 0), (0, m_pad - M)))

    # Hoist all loop-invariant work out of the kernel (one-time XLA ops).
    # MXU operands stay in the input dtype (bf16-native if bf16 input);
    # norms / sigma terms are f32 for accuracy.
    ct = c_p.astype(x.dtype).T                                    # (D, m_pad)
    x2 = jnp.sum(jnp.square(x_p.astype(jnp.float32)),
                 axis=-1, keepdims=True)                          # (n_pad, 1)
    c2 = jnp.sum(jnp.square(c_p.astype(jnp.float32)), axis=-1)    # (m_pad,)
    ns2 = -jnp.square(s_p.astype(jnp.float32)[0])                 # (m_pad,)
    cs = jnp.stack([c2, ns2], axis=0)                             # (2, m_pad)

    # Grid: put the axis with more blocks first so megacore (v7x) always has
    # >= 2 blocks to shard; both axes are fully parallel.
    gi, gj = n_pad // tm, m_pad // tn
    i_first = gi >= gj
    grid = (gi, gj) if i_first else (gj, gi)

    def _ij(a, b):
        return (a, b) if i_first else (b, a)

    def x_map(a, b):
        i, _ = _ij(a, b); return (i, 0)

    def x2_map(a, b):
        i, _ = _ij(a, b); return (i, 0)

    def ct_map(a, b):
        _, j = _ij(a, b); return (0, j)

    def cs_map(a, b):
        _, j = _ij(a, b); return (0, j)

    def o_map(a, b):
        i, j = _ij(a, b); return (i, j)

    cost = pl.CostEstimate(
        flops=2 * n_pad * m_pad * D,
        transcendentals=n_pad * m_pad,
        bytes_accessed=(n_pad * D * xbytes + D * m_pad * xbytes
                        + n_pad * 4 + 2 * m_pad * 4
                        + n_pad * m_pad * obytes))

    out = pl.pallas_call(
        _rbf_kernel,
        out_shape=jax.ShapeDtypeStruct((n_pad, m_pad), x.dtype),
        grid_spec=pltpu.PrefetchScalarGridSpec(
            num_scalar_prefetch=0,
            grid=grid,
            in_specs=[
                pl.BlockSpec((tm, D), x_map),     # x tile
                pl.BlockSpec((tm, 1), x2_map),    # ||x||^2 tile
                pl.BlockSpec((D, tn), ct_map),    # centres^T tile
                pl.BlockSpec((2, tn), cs_map),    # stacked ||c||^2 / -sigma^2
            ],
            out_specs=pl.BlockSpec((tm, tn), o_map),
        ),
        compiler_params=pltpu.CompilerParams(
            dimension_semantics=("parallel", "parallel")),
        cost_estimate=cost,
    )(x_p, x2, ct, cs)

    return out[:N, :M]


def rbf_reference(x, centres, sigmas):
    """Pure-JAX reference matching torch.cdist semantics + gaussian basis."""
    diff = x[:, None, :] - centres[None, :, :]
    d = jnp.sqrt(jnp.sum(diff * diff, axis=-1))
    d = d * jnp.abs(sigmas)
    return jnp.exp(-(d * d))


if __name__ == "__main__":
    key = jax.random.PRNGKey(0)
    kx, kc = jax.random.split(key)

    N, in_features, out_features = 8, 32, 16

    x = jax.random.normal(kx, (N, in_features), dtype=jnp.float32)
    # centres ~ N(0, 1), sigmas = ones  (matches reset_parameters defaults)
    centres = jax.random.normal(kc, (out_features, in_features), dtype=jnp.float32)
    sigmas = jnp.ones((1, out_features), dtype=jnp.float32)

    out = rbf_forward(x, centres, sigmas)
    out = jax.block_until_ready(out)

    ref = rbf_reference(x, centres, sigmas)
    assert out.shape == (N, out_features)
    assert jnp.allclose(out, ref, atol=1e-5, rtol=1e-5), "mismatch vs reference"

    print("KERNEL_OK")
</pallas_src>

<mosaic_0001>
module attributes {stable_mosaic.version = 11 : i64} {
  func.func @_rbf_kernel(%arg0: i32, %arg1: i32, %arg2: memref<8x32xf32, #tpu.memory_space<vmem>>, %arg3: memref<8x1xf32, #tpu.memory_space<vmem>>, %arg4: memref<32x128xf32, #tpu.memory_space<vmem>>, %arg5: memref<2x128xf32, #tpu.memory_space<vmem>>, %arg6: memref<8x128xf32, #tpu.memory_space<vmem>>) attributes {dimension_semantics = [#tpu.dimension_semantics<parallel>, #tpu.dimension_semantics<parallel>], iteration_bounds = array<i64: 1, 1>, scalar_prefetch = 0 : i64, scratch_operands = 0 : i64, tpu.core_type = #tpu.core_type<tc>, window_params = [{transform_indices = @transform_0, window_bounds = array<i64: 8, 32>}, {transform_indices = @transform_1, window_bounds = array<i64: 8, 1>}, {transform_indices = @transform_2, window_bounds = array<i64: 32, 128>}, {transform_indices = @transform_3, window_bounds = array<i64: 2, 128>}, {transform_indices = @transform_4, window_bounds = array<i64: 8, 128>}]} {
    %c0 = arith.constant 0 : index
    %c0_0 = arith.constant 0 : index
    %0 = vector.load %arg2[%c0, %c0_0] : memref<8x32xf32, #tpu.memory_space<vmem>>, vector<8x32xf32>
    %c0_1 = arith.constant 0 : index
    %c0_2 = arith.constant 0 : index
    %1 = vector.load %arg4[%c0_1, %c0_2] : memref<32x128xf32, #tpu.memory_space<vmem>>, vector<32x128xf32>
    %c0_3 = arith.constant 0 : index
    %c0_4 = arith.constant 0 : index
    %2 = vector.load %arg3[%c0_3, %c0_4] : memref<8x1xf32, #tpu.memory_space<vmem>>, vector<8x1xf32>
    %c0_5 = arith.constant 0 : index
    %c0_6 = arith.constant 0 : index
    %3 = vector.load %arg5[%c0_5, %c0_6] : memref<2x128xf32, #tpu.memory_space<vmem>>, vector<1x128xf32>
    %c1 = arith.constant 1 : index
    %c0_7 = arith.constant 0 : index
    %4 = vector.load %arg5[%c1, %c0_7] : memref<2x128xf32, #tpu.memory_space<vmem>>, vector<1x128xf32>
    %cst = arith.constant dense<0.000000e+00> : vector<8x128xf32>
    %5 = tpu.matmul %0, %1, %cst {dimension_numbers = #tpu.dot_dimension_numbers<[1], [0], [0], [1], [0, 0, 1, 1], [], []>} : vector<8x32xf32>, vector<32x128xf32>, vector<8x128xf32> -> vector<8x128xf32>
    %6 = vector.broadcast %2 : vector<8x1xf32> to vector<8x128xf32>
    %7 = vector.broadcast %3 : vector<1x128xf32> to vector<8x128xf32>
    %8 = arith.addf %6, %7 : vector<8x128xf32>
    %cst_8 = arith.constant 2.000000e+00 : f32
    %9 = vector.broadcast %cst_8 : f32 to vector<8x128xf32>
    %10 = arith.mulf %9, %5 : vector<8x128xf32>
    %11 = arith.subf %8, %10 : vector<8x128xf32>
    %12 = vector.broadcast %4 : vector<1x128xf32> to vector<8x128xf32>
    %13 = arith.mulf %11, %12 : vector<8x128xf32>
    %cst_9 = arith.constant 0.000000e+00 : f32
    %14 = vector.broadcast %cst_9 : f32 to vector<8x128xf32>
    %15 = arith.minimumf %13, %14 : vector<8x128xf32>
    %16 = math.exp %15 : vector<8x128xf32>
    %c0_10 = arith.constant 0 : index
    %c0_11 = arith.constant 0 : index
    %17 = vector.load %arg6[%c0_10, %c0_11] : memref<8x128xf32, #tpu.memory_space<vmem>>, vector<8x128xf32>
    tpu.vector_store %arg6[%c0_10, %c0_11], %16 {strides = array<i32>} : memref<8x128xf32, #tpu.memory_space<vmem>>, vector<8x128xf32>,
    return
  }
  func.func @transform_0(%arg0: i32, %arg1: i32) -> (i32, i32) {
    %c0_i32 = arith.constant 0 : i32
    %c0_i32_0 = arith.constant 0 : i32
    return %arg0, %c0_i32 : i32, i32
  }
  func.func @transform_1(%arg0: i32, %arg1: i32) -> (i32, i32) {
    %c0_i32 = arith.constant 0 : i32
    %c0_i32_0 = arith.constant 0 : i32
    return %arg0, %c0_i32 : i32, i32
  }
  func.func @transform_2(%arg0: i32, %arg1: i32) -> (i32, i32) {
    %c0_i32 = arith.constant 0 : i32
    %c0_i32_0 = arith.constant 0 : i32
    return %c0_i32, %arg1 : i32, i32
  }
  func.func @transform_3(%arg0: i32, %arg1: i32) -> (i32, i32) {
    %c0_i32 = arith.constant 0 : i32
    %c0_i32_0 = arith.constant 0 : i32
    return %c0_i32, %arg1 : i32, i32
  }
  func.func @transform_4(%arg0: i32, %arg1: i32) -> (i32, i32) {
    %c0_i32 = arith.constant 0 : i32
    return %arg0, %arg1 : i32, i32
  }
}

</mosaic_0001>

<llo_original>
// kernel: rbf_forward.1
$region0: #{rbf_forward.1}
  #allocation0 [shape = 'u32[]', space=smem, size = 0x4, offset = 0x4, fixed_abs, tag = 'smem constant byte address 0x4 - core index']
  #allocation1 [shape = 'u32[144,128]{1,0:T(1,128)}', space=vmem, size = 0x12000, scoped, tag = 'internal scratch']
  %s0 = inlined_call_operand.vmem [shape: f32[8,32], index: 0, kind: input, shape index: {}]
  %s1 = inlined_call_operand.vmem [shape: f32[8,1], index: 1, kind: input, shape index: {}]
  %s2 = inlined_call_operand.vmem [shape: f32[32,128], index: 2, kind: input, shape index: {}]
  %s3 = inlined_call_operand.vmem [shape: f32[2,128], index: 3, kind: input, shape index: {}]
  %s4 = inlined_call_operand.hbm [shape: f32[8,128], index: 4, kind: output, shape index: {}]
  %s5 = sld [smem:[#allocation0]]
  $region26: #{rbf_forward.1} parent=0
    _
  %s7 = ssub.s32 1, %s5
  %s8 = scalar_select 0, %s7, %s5
  $region1: #{rbf_forward.1} parent=0
    #allocation2 [shape = 'u8[4096]{0}', space=vmem, size = 0x1000, scoped, tag = 'output window, operand 0, single buffered']
    #allocation3 [shape = 's32[1]{0}', space=sflag, size = 0x4, scoped, tag = 'scoped memory for rbf_forward.1']
    %9 = vsyncpa [#allocation3], 0
    // Predicated region
    $region2: #{rbf_forward.1} parent=1 // pred_check
      _
    $region3: #{rbf_forward.1} parent=1 // pred_check_branch
      %11 = sbr.rel (0) target = $region5
    $region4: #{rbf_forward.1} parent=1 // pred_region
      _
    $region5: #{rbf_forward.1} parent=1 // pred_fallthru
      _
    // Predicated region
    $region6: #{rbf_forward.1} parent=1 // pred_check
      _
    $region7: #{rbf_forward.1} parent=1 // pred_check_branch
      %13 = sbr.rel (0) target = $region9
    $region8: #{rbf_forward.1} parent=1 // pred_region
      _
    $region9: #{rbf_forward.1} parent=1 // pred_fallthru
      _
    // Predicated region
    $region10: #{rbf_forward.1} parent=1 // pred_check
      _
    $region11: #{rbf_forward.1} parent=1 // pred_check_branch
      %15 = sbr.rel (0) target = $region13
    $region12: #{rbf_forward.1} parent=1 // pred_region
      _
    $region13: #{rbf_forward.1} parent=1 // pred_fallthru
      _
    // Predicated region
    $region14: #{rbf_forward.1} parent=1 // pred_check
      _
    $region15: #{rbf_forward.1} parent=1 // pred_check_branch
      %17 = sbr.rel (0) target = $region17
    $region16: #{rbf_forward.1} parent=1 // pred_region
      _
    $region17: #{rbf_forward.1} parent=1 // pred_fallthru
      _
    %v18 = vld [vmem:[%s0] sm:$0xff]
    %v19 = vld [vmem:[%s2] sm:$0xff]
    %v20 = vld [vmem:[%s2 + $0x8] sm:$0xff]
    %v21 = vld [vmem:[%s2 + $0x10] sm:$0xff]
    %v22 = vld [vmem:[%s2 + $0x18] sm:$0xff]
    %v23 = vld [vmem:[%s1] sm:$0xff]
    %v24 = vld [vmem:[%s3] sm:$0x1]
    %v25 = vld [vmem:[%s3 + $0x1] sm:$0x1]
    %vm26 = vcmask 261120
    %v28 = vsel %vm26, %v18, 0
    %30 = vmatprep.subr.mxu0 0.0
    %31 = vmatpush1.msra.mxu0 0.0
    %32 = vmatprep.subr.mxu0 0.0
    %33 = vmatpush1.msra.mxu0 0.0
    %34 = vmatprep.subr.mxu0 0.0
    %35 = vmatpush1.msra.mxu0 0.0
    %36 = vmatprep.subr.mxu0 0.0
    %37 = vmatpush1.msra.mxu0 0.0
    %38 = vmatprep.subr.mxu0 0.0
    %39 = vmatpush1.msra.mxu0 0.0
    %40 = vmatprep.subr.mxu0 0.0
    %41 = vmatpush1.msra.mxu0 0.0
    %42 = vmatprep.subr.mxu0 0.0
    %43 = vmatpush1.msra.mxu0 0.0
    %44 = vmatprep.subr.mxu0 0.0
    %45 = vmatpush1.msra.mxu0 0.0
    %46 = vmatprep.subr.mxu0 0.0
    %47 = vmatpush1.msra.mxu0 0.0
    %48 = vmatprep.subr.mxu0 0.0
    %49 = vmatpush1.msra.mxu0 0.0
    %50 = vmatprep.subr.mxu0 0.0
    %51 = vmatpush1.msra.mxu0 0.0
    %52 = vmatprep.subr.mxu0 0.0
    %53 = vmatpush1.msra.mxu0 0.0
    %54 = vmatprep.subr.mxu0 0.0
    %55 = vmatpush1.msra.mxu0 %v22
    %56 = vmatprep.subr.mxu0 0.0
    %57 = vmatpush1.msra.mxu0 %v21
    %58 = vmatprep.subr.mxu0 0.0
    %59 = vmatpush1.msra.mxu0 %v20
    %60 = vmatprep.subr.mxu0 0.0
    %61 = vmatpush1.msra.mxu0 %v19
    %62 = vmatprep.subr.mxu0 0.0
    %63 = vmatpush2.msra.mxu0 0.0
    %64 = vmatprep.subr.mxu0 0.0
    %65 = vmatpush2.msra.mxu0 0.0
    %66 = vmatprep.subr.mxu0 0.0
    %67 = vmatpush2.msra.mxu0 0.0
    %68 = vmatprep.subr.mxu0 0.0
    %69 = vmatpush2.msra.mxu0 0.0
    %70 = vmatprep.subr.mxu0 0.0
    %71 = vmatpush2.msra.mxu0 0.0
    %72 = vmatprep.subr.mxu0 0.0
    %73 = vmatpush2.msra.mxu0 0.0
    %74 = vmatprep.subr.mxu0 0.0
    %75 = vmatpush2.msra.mxu0 0.0
    %76 = vmatprep.subr.mxu0 0.0
    %77 = vmatpush2.msra.mxu0 0.0
    %78 = vmatprep.subr.mxu0 0.0
    %79 = vmatpush2.msra.mxu0 0.0
    %80 = vmatprep.subr.mxu0 0.0
    %81 = vmatpush2.msra.mxu0 0.0
    %82 = vmatprep.subr.mxu0 0.0
    %83 = vmatpush2.msra.mxu0 0.0
    %84 = vmatprep.subr.mxu0 0.0
    %85 = vmatpush2.msra.mxu0 0.0
    %86 = vmatprep.subr.mxu0 0.0
    %87 = vmatpush2.msra.mxu0 0.0
    %88 = vmatprep.subr.mxu0 0.0
    %89 = vmatpush2.msra.mxu0 0.0
    %90 = vmatprep.subr.mxu0 0.0
    %91 = vmatpush2.msra.mxu0 0.0
    %92 = vmatprep.subr.mxu0 0.0
    %93 = vmatpush2.msra.mxu0 0.0
    %94 = vmatprep.mubr.f32.mxu0 0.0
    %95 = vmatmul.mubr.f32.gmra.mxu0 %v28
    %v96 = vpop.f32.mrf.mxu0
    %v97 = vadd.f32 0.0, %v96
    %v98 = vpop.f32.mrf.mxu0
    %99 = vdwg.mxu0
    %101 = vset.pattern.permute.xlu0 0
    %102 = vperm.xlu0 %101, %v23
    %v103 = vpop.permute.xlu0 %102
    %v105 = vlaneseq
    %v106 = vshrl.u32 %v105, 7
    %v107 = vsub.s32 0, %v106
    %v108 = vrot.slane %v24, %v107
    %v109 = vadd.f32 %v103, %v108
    %v110 = vmul.f32 %v97, 2.0
    %v111 = vsub.f32 %v109, %v110
    %v112 = vlaneseq
    %v113 = vshrl.u32 %v112, 7
    %v114 = vsub.s32 0, %v113
    %v115 = vrot.slane %v25, %v114
    %v116 = vmul.f32 %v111, %v115
    %v117 = vmin.f32 %v116, 0.0
    %v118 = vmul.f32 %v117, 1.442695
    %v119 = vpow.pop %v118
    %120 = vst [vmem:[#allocation2] sm:$0xff] %v119
    // Predicated region
    $region18: #{rbf_forward.1} parent=1 // pred_check
      _
    $region19: #{rbf_forward.1} parent=1 // pred_check_branch
      %122 = sbr.rel (0) target = $region21
    $region20: #{rbf_forward.1} parent=1 // pred_region
      %s124 = ssub.s32 128, 128
      %125 = vsyncadd [#allocation3], %s124
      %s127 = sshll.u32 [#allocation2], 4
      %s128 = int_to_ptr.vmem [resolvable:$true] %s127
      %130 = dma.vmem_to_hbm [thread:$0]  %s128, 128, %s4, [#allocation3]
    $region21: #{rbf_forward.1} parent=1 // pred_fallthru
      _
    // Predicated region
    $region22: #{rbf_forward.1} parent=1 // pred_check
      _
    $region23: #{rbf_forward.1} parent=1 // pred_check_branch
      %132 = sbr.rel (0) target = $region25
    $region24: #{rbf_forward.1} parent=1 // pred_region
      %133 = dma.done [#allocation3], 128
    $region25: #{rbf_forward.1} parent=1 // pred_fallthru
      _
    %134 = vsyncpa [#allocation3], 1

</llo_original>
